<compile_context>
chip_gen: v5e
topology: v5e:2x2
jax: 0.10.0
libtpu: 0.0.40
codegen_flags: <defaults>
</compile_context>

<pallas_src>
import functools

import jax
import jax.numpy as jnp
from jax.experimental import pallas as pl
from jax.experimental.pallas import tpu as pltpu

HIDDEN_DIM = 100   # logical hidden dim (matches the PyTorch module)
LANE = 128         # TPU lane width; hidden/output feature dims padded to this
MAX_BATCH_TILE = 1024


def _round_up(x, m):
    return (x + m - 1) // m * m


def _pad2(a, rows, cols):
    r, c = a.shape
    return jnp.pad(a, ((0, rows - r), (0, cols - c)))


def _softplus(x):
    # Numerically stable softplus: max(x,0) + log1p(exp(-|x|)).
    # Matches torch.nn.Softplus (beta=1, threshold=20) to within f32 epsilon.
    return jnp.maximum(x, 0.0) + jnp.log1p(jnp.exp(-jnp.abs(x)))


def _mlp_kernel(t_ref, w1_ref, b1_ref, w2_ref, b2_ref, w3_ref, b3_ref, o_ref):
    # Matmuls in bf16 on the MXU with f32 accumulation; bias add + softplus in f32.
    t = t_ref[...].astype(jnp.bfloat16)
    h1 = _softplus(
        jnp.dot(t, w1_ref[...], preferred_element_type=jnp.float32) + b1_ref[...]
    )
    h2 = _softplus(
        jnp.dot(h1.astype(jnp.bfloat16), w2_ref[...],
                preferred_element_type=jnp.float32) + b2_ref[...]
    )
    o_ref[...] = (
        jnp.dot(h2.astype(jnp.bfloat16), w3_ref[...],
                preferred_element_type=jnp.float32) + b3_ref[...]
    )


def pad_params(params):
    """Zero-pad hidden/output feature dims to 128 and cast weights to bf16 (once).

    w1 keeps its logical K dim (= input_dim) so the activations never need a
    wrapper-side feature pad.  Zero padding keeps the result exact: padded rows
    of W2/W3 are zero, so softplus(0)=log(2) values in padded hidden lanes
    contribute nothing downstream; biases stay f32 for the f32 bias add.
    """
    w1, b1, w2, b2, w3, b3 = params
    in_dim, hid = w1.shape
    out_dim = w3.shape[1]
    hid_p = _round_up(hid, LANE)
    out_p = _round_up(out_dim, LANE)
    return (
        _pad2(w1, in_dim, hid_p).astype(jnp.bfloat16),
        _pad2(b1, 1, hid_p).astype(jnp.float32),
        _pad2(w2, hid_p, hid_p).astype(jnp.bfloat16),
        _pad2(b2, 1, hid_p).astype(jnp.float32),
        _pad2(w3, hid_p, out_p).astype(jnp.bfloat16),
        _pad2(b3, 1, out_p).astype(jnp.float32),
    )


@functools.partial(jax.jit, static_argnames=("out_dim",))
def residual_neural_ode_forward(x, t, padded_params, *, out_dim):
    """Pallas implementation of ResidualNeuralODEModel.forward(x, t).

    `x` is intentionally unused (the PyTorch forward overwrites x with t).
    `padded_params` come from pad_params(); `out_dim` is the logical output
    width to slice back to.
    """
    del x  # semantics of the reference module: x = t
    w1, b1, w2, b2, w3, b3 = padded_params
    batch, in_dim = t.shape
    hid_p = w1.shape[1]
    out_p = w3.shape[1]

    # Batch tiling: big tiles to amortize per-step overhead, but at least two
    # grid steps (when batch > 8) so the parallel axis can use both v7x cores.
    batch8 = _round_up(batch, 8)
    if batch8 <= 8:
        tb = 8
    else:
        tb = min(MAX_BATCH_TILE, _round_up(pl.cdiv(batch8, 2), 8))
    grid = (pl.cdiv(batch, tb),)

    resident = lambda shape: pl.BlockSpec(shape, lambda i: (0, 0))

    flops = 2 * batch * (in_dim * hid_p + hid_p * hid_p + hid_p * out_p)
    bytes_accessed = (
        4 * (batch * in_dim + batch * out_p)              # f32 activations in/out
        + 2 * (in_dim * hid_p + hid_p * hid_p + hid_p * out_p)  # bf16 weights
        + 4 * (2 * hid_p + out_p)                          # f32 biases
    )
    cost = pl.CostEstimate(
        flops=flops,
        transcendentals=4 * batch * hid_p,  # exp + log1p, two softplus layers
        bytes_accessed=bytes_accessed,
    )

    out_padded = pl.pallas_call(
        _mlp_kernel,
        out_shape=jax.ShapeDtypeStruct((batch, out_p), jnp.float32),
        grid=grid,
        in_specs=[
            # Activations: tiled over batch, feature dim left at its real size
            # (legal since it equals the full array dim) -> no wrapper pad.
            pl.BlockSpec((tb, in_dim), lambda i: (i, 0)),
            resident((in_dim, hid_p)),                    # weights/biases: VMEM-resident
            resident((1, hid_p)),
            resident((hid_p, hid_p)),
            resident((1, hid_p)),
            resident((hid_p, out_p)),
            resident((1, out_p)),
        ],
        out_specs=pl.BlockSpec((tb, out_p), lambda i: (i, 0)),
        compiler_params=pltpu.CompilerParams(
            dimension_semantics=("parallel",),
        ),
        cost_estimate=cost,
    )(t.astype(jnp.float32), w1, b1, w2, b2, w3, b3)

    return out_padded[:, :out_dim]


def init_params(key, input_dim, output_dim, hidden_dim=HIDDEN_DIM):
    """Deterministic init mimicking nn.Linear's default U(-1/sqrt(fan_in), +...)."""
    def linear(k, fan_in, fan_out):
        kw, kb = jax.random.split(k)
        bound = 1.0 / jnp.sqrt(jnp.float32(fan_in))
        w = jax.random.uniform(kw, (fan_in, fan_out), jnp.float32, -bound, bound)
        b = jax.random.uniform(kb, (1, fan_out), jnp.float32, -bound, bound)
        return w, b

    k1, k2, k3 = jax.random.split(key, 3)
    w1, b1 = linear(k1, input_dim, hidden_dim)
    w2, b2 = linear(k2, hidden_dim, hidden_dim)
    w3, b3 = linear(k3, hidden_dim, output_dim)
    return (w1, b1, w2, b2, w3, b3)


def _reference_forward(x, t, params):
    del x
    w1, b1, w2, b2, w3, b3 = params
    h = jax.nn.softplus(t @ w1 + b1)
    h = jax.nn.softplus(h @ w2 + b2)
    return h @ w3 + b3


if __name__ == "__main__":
    input_dim = 8
    output_dim = 8

    key = jax.random.PRNGKey(0)
    k_params, k_x, k_t = jax.random.split(key, 3)

    params = init_params(k_params, input_dim, output_dim)
    padded = pad_params(params)  # pad + bf16-cast once, reuse across RHS evals

    # bf16 MXU operands => relaxed tolerance vs the f32 pure-JAX reference.
    TOL = dict(atol=5e-2, rtol=5e-2)

    # Case 1: the typical small ODE-RHS batch (single grid step).
    batch = 8
    x = jax.random.normal(k_x, (batch, input_dim), jnp.float32)  # ignored by forward
    t = jax.random.normal(k_t, (batch, input_dim), jnp.float32)
    out = jax.block_until_ready(
        residual_neural_ode_forward(x, t, padded, out_dim=output_dim))
    ref = _reference_forward(x, t, params)
    assert out.shape == (batch, output_dim)
    assert jnp.allclose(out, ref, **TOL), "mismatch vs pure-JAX reference (batch=8)"

    # Case 2: multi-step grid with a partial final block (batch not a tile multiple).
    batch2 = 20
    t2 = jax.random.normal(jax.random.PRNGKey(1), (batch2, input_dim), jnp.float32)
    out2 = jax.block_until_ready(
        residual_neural_ode_forward(t2, t2, padded, out_dim=output_dim))
    ref2 = _reference_forward(t2, t2, params)
    assert out2.shape == (batch2, output_dim)
    assert jnp.allclose(out2, ref2, **TOL), "mismatch vs pure-JAX reference (batch=20)"

    print("KERNEL_OK")
</pallas_src>

<mosaic_0001>
module attributes {stable_mosaic.version = 11 : i64} {
  func.func @_mlp_kernel(%arg0: i32, %arg1: memref<8x8xf32, #tpu.memory_space<vmem>>, %arg2: memref<8x128xbf16, #tpu.memory_space<vmem>>, %arg3: memref<1x128xf32, #tpu.memory_space<vmem>>, %arg4: memref<128x128xbf16, #tpu.memory_space<vmem>>, %arg5: memref<1x128xf32, #tpu.memory_space<vmem>>, %arg6: memref<128x128xbf16, #tpu.memory_space<vmem>>, %arg7: memref<1x128xf32, #tpu.memory_space<vmem>>, %arg8: memref<8x128xf32, #tpu.memory_space<vmem>>) attributes {dimension_semantics = [#tpu.dimension_semantics<parallel>], iteration_bounds = array<i64: 1>, scalar_prefetch = 0 : i64, scratch_operands = 0 : i64, tpu.core_type = #tpu.core_type<tc>, window_params = [{transform_indices = @transform_0, window_bounds = array<i64: 8, 8>}, {pipeline_mode = #tpu.pipeline_mode<synchronous>, transform_indices = @transform_1, window_bounds = array<i64: 8, 128>}, {pipeline_mode = #tpu.pipeline_mode<synchronous>, transform_indices = @transform_2, window_bounds = array<i64: 1, 128>}, {pipeline_mode = #tpu.pipeline_mode<synchronous>, transform_indices = @transform_3, window_bounds = array<i64: 128, 128>}, {pipeline_mode = #tpu.pipeline_mode<synchronous>, transform_indices = @transform_4, window_bounds = array<i64: 1, 128>}, {pipeline_mode = #tpu.pipeline_mode<synchronous>, transform_indices = @transform_5, window_bounds = array<i64: 128, 128>}, {pipeline_mode = #tpu.pipeline_mode<synchronous>, transform_indices = @transform_6, window_bounds = array<i64: 1, 128>}, {transform_indices = @transform_7, window_bounds = array<i64: 8, 128>}]} {
    %c0 = arith.constant 0 : index
    %c0_0 = arith.constant 0 : index
    %0 = vector.load %arg1[%c0, %c0_0] : memref<8x8xf32, #tpu.memory_space<vmem>>, vector<8x8xf32>
    %1 = arith.truncf %0 : vector<8x8xf32> to vector<8x8xbf16>
    %c0_1 = arith.constant 0 : index
    %c0_2 = arith.constant 0 : index
    %2 = vector.load %arg2[%c0_1, %c0_2] : memref<8x128xbf16, #tpu.memory_space<vmem>>, vector<8x128xbf16>
    %cst = arith.constant dense<0.000000e+00> : vector<8x128xf32>
    %3 = tpu.matmul %1, %2, %cst {dimension_numbers = #tpu.dot_dimension_numbers<[1], [0], [0], [1], [0, 0, 1, 1], [], []>} : vector<8x8xbf16>, vector<8x128xbf16>, vector<8x128xf32> -> vector<8x128xf32>
    %c0_3 = arith.constant 0 : index
    %c0_4 = arith.constant 0 : index
    %4 = vector.load %arg3[%c0_3, %c0_4] : memref<1x128xf32, #tpu.memory_space<vmem>>, vector<1x128xf32>
    %5 = vector.broadcast %4 : vector<1x128xf32> to vector<8x128xf32>
    %6 = arith.addf %3, %5 : vector<8x128xf32>
    %cst_5 = arith.constant 0.000000e+00 : f32
    %7 = vector.broadcast %cst_5 : f32 to vector<8x128xf32>
    %8 = arith.maximumf %6, %7 : vector<8x128xf32>
    %9 = math.absf %6 : vector<8x128xf32>
    %cst_6 = arith.constant 0.000000e+00 : f32
    %10 = vector.broadcast %cst_6 : f32 to vector<8x128xf32>
    %11 = arith.subf %10, %9 : vector<8x128xf32>
    %12 = math.exp %11 : vector<8x128xf32>
    %13 = math.log1p %12 : vector<8x128xf32>
    %14 = arith.addf %8, %13 : vector<8x128xf32>
    %15 = arith.truncf %14 : vector<8x128xf32> to vector<8x128xbf16>
    %c0_7 = arith.constant 0 : index
    %c0_8 = arith.constant 0 : index
    %16 = vector.load %arg4[%c0_7, %c0_8] : memref<128x128xbf16, #tpu.memory_space<vmem>>, vector<128x128xbf16>
    %cst_9 = arith.constant dense<0.000000e+00> : vector<8x128xf32>
    %17 = tpu.matmul %15, %16, %cst_9 {dimension_numbers = #tpu.dot_dimension_numbers<[1], [0], [0], [1], [0, 0, 1, 1], [], []>} : vector<8x128xbf16>, vector<128x128xbf16>, vector<8x128xf32> -> vector<8x128xf32>
    %c0_10 = arith.constant 0 : index
    %c0_11 = arith.constant 0 : index
    %18 = vector.load %arg5[%c0_10, %c0_11] : memref<1x128xf32, #tpu.memory_space<vmem>>, vector<1x128xf32>
    %19 = vector.broadcast %18 : vector<1x128xf32> to vector<8x128xf32>
    %20 = arith.addf %17, %19 : vector<8x128xf32>
    %cst_12 = arith.constant 0.000000e+00 : f32
    %21 = vector.broadcast %cst_12 : f32 to vector<8x128xf32>
    %22 = arith.maximumf %20, %21 : vector<8x128xf32>
    %23 = math.absf %20 : vector<8x128xf32>
    %cst_13 = arith.constant 0.000000e+00 : f32
    %24 = vector.broadcast %cst_13 : f32 to vector<8x128xf32>
    %25 = arith.subf %24, %23 : vector<8x128xf32>
    %26 = math.exp %25 : vector<8x128xf32>
    %27 = math.log1p %26 : vector<8x128xf32>
    %28 = arith.addf %22, %27 : vector<8x128xf32>
    %29 = arith.truncf %28 : vector<8x128xf32> to vector<8x128xbf16>
    %c0_14 = arith.constant 0 : index
    %c0_15 = arith.constant 0 : index
    %30 = vector.load %arg6[%c0_14, %c0_15] : memref<128x128xbf16, #tpu.memory_space<vmem>>, vector<128x128xbf16>
    %cst_16 = arith.constant dense<0.000000e+00> : vector<8x128xf32>
    %31 = tpu.matmul %29, %30, %cst_16 {dimension_numbers = #tpu.dot_dimension_numbers<[1], [0], [0], [1], [0, 0, 1, 1], [], []>} : vector<8x128xbf16>, vector<128x128xbf16>, vector<8x128xf32> -> vector<8x128xf32>
    %c0_17 = arith.constant 0 : index
    %c0_18 = arith.constant 0 : index
    %32 = vector.load %arg7[%c0_17, %c0_18] : memref<1x128xf32, #tpu.memory_space<vmem>>, vector<1x128xf32>
    %33 = vector.broadcast %32 : vector<1x128xf32> to vector<8x128xf32>
    %34 = arith.addf %31, %33 : vector<8x128xf32>
    %c0_19 = arith.constant 0 : index
    %c0_20 = arith.constant 0 : index
    %35 = vector.load %arg8[%c0_19, %c0_20] : memref<8x128xf32, #tpu.memory_space<vmem>>, vector<8x128xf32>
    tpu.vector_store %arg8[%c0_19, %c0_20], %34 {strides = array<i32>} : memref<8x128xf32, #tpu.memory_space<vmem>>, vector<8x128xf32>,
    return
  }
  func.func @transform_0(%arg0: i32) -> (i32, i32) {
    %c0_i32 = arith.constant 0 : i32
    %c0_i32_0 = arith.constant 0 : i32
    return %arg0, %c0_i32 : i32, i32
  }
  func.func @transform_1(%arg0: i32) -> (i32, i32) {
    %c0_i32 = arith.constant 0 : i32
    %c0_i32_0 = arith.constant 0 : i32
    %c0_i32_1 = arith.constant 0 : i32
    return %c0_i32, %c0_i32_0 : i32, i32
  }
  func.func @transform_2(%arg0: i32) -> (i32, i32) {
    %c0_i32 = arith.constant 0 : i32
    %c0_i32_0 = arith.constant 0 : i32
    %c0_i32_1 = arith.constant 0 : i32
    return %c0_i32, %c0_i32_0 : i32, i32
  }
  func.func @transform_3(%arg0: i32) -> (i32, i32) {
    %c0_i32 = arith.constant 0 : i32
    %c0_i32_0 = arith.constant 0 : i32
    %c0_i32_1 = arith.constant 0 : i32
    return %c0_i32, %c0_i32_0 : i32, i32
  }
  func.func @transform_4(%arg0: i32) -> (i32, i32) {
    %c0_i32 = arith.constant 0 : i32
    %c0_i32_0 = arith.constant 0 : i32
    %c0_i32_1 = arith.constant 0 : i32
    return %c0_i32, %c0_i32_0 : i32, i32
  }
  func.func @transform_5(%arg0: i32) -> (i32, i32) {
    %c0_i32 = arith.constant 0 : i32
    %c0_i32_0 = arith.constant 0 : i32
    %c0_i32_1 = arith.constant 0 : i32
    return %c0_i32, %c0_i32_0 : i32, i32
  }
  func.func @transform_6(%arg0: i32) -> (i32, i32) {
    %c0_i32 = arith.constant 0 : i32
    %c0_i32_0 = arith.constant 0 : i32
    %c0_i32_1 = arith.constant 0 : i32
    return %c0_i32, %c0_i32_0 : i32, i32
  }
  func.func @transform_7(%arg0: i32) -> (i32, i32) {
    %c0_i32 = arith.constant 0 : i32
    %c0_i32_0 = arith.constant 0 : i32
    return %arg0, %c0_i32 : i32, i32
  }
}

</mosaic_0001>

<llo_original>
// kernel: residual_neural_ode_forward.1
$region0: #{residual_neural_ode_forward.1}
  #allocation0 [shape = 'u32[]', space=smem, size = 0x4, offset = 0x4, fixed_abs, tag = 'smem constant byte address 0x4 - core index']
  #allocation1 [shape = 'u32[72,128]{1,0:T(1,128)}', space=vmem, size = 0x9000, scoped, tag = 'internal scratch']
  %s0 = inlined_call_operand.hbm [shape: f32[8,8], index: 0, kind: input, shape index: {}]
  %s1 = inlined_call_operand.hbm [shape: bf16[8,128], index: 1, kind: input, shape index: {}]
  %s2 = inlined_call_operand.vmem [shape: f32[1,128], index: 2, kind: input, shape index: {}]
  %s3 = inlined_call_operand.hbm [shape: bf16[128,128], index: 3, kind: input, shape index: {}]
  %s4 = inlined_call_operand.vmem [shape: f32[1,128], index: 4, kind: input, shape index: {}]
  %s5 = inlined_call_operand.hbm [shape: bf16[128,128], index: 5, kind: input, shape index: {}]
  %s6 = inlined_call_operand.vmem [shape: f32[1,128], index: 6, kind: input, shape index: {}]
  %s7 = inlined_call_operand.hbm [shape: f32[8,128], index: 7, kind: output, shape index: {}]
  %s8 = sld [smem:[#allocation0]]
  $region54: #{residual_neural_ode_forward.1} parent=0
    _
  %s10 = ssub.s32 1, %s8
  %s11 = scalar_select 0, %s10, %s8
  $region1: #{residual_neural_ode_forward.1} parent=0
    #allocation2 [shape = 'u8[4096]{0}', space=vmem, size = 0x1000, scoped, tag = 'input window, operand 0, single buffered']
    #allocation3 [shape = 's32[1]{0}', space=sflag, size = 0x4, scoped, tag = 'scoped memory for residual_neural_ode_forward.1']
    #allocation4 [shape = 's32[1]{0}', space=sflag, size = 0x4, scoped, tag = 'scoped memory for residual_neural_ode_forward.1']
    #allocation5 [shape = 'u8[2048]{0}', space=vmem, size = 0x800, scoped, tag = 'input window, operand 1, single buffered']
    #allocation6 [shape = 's32[1]{0}', space=sflag, size = 0x4, scoped, tag = 'scoped memory for residual_neural_ode_forward.1']
    #allocation7 [shape = 'u8[32768]{0}', space=vmem, size = 0x8000, scoped, tag = 'input window, operand 3, single buffered']
    #allocation8 [shape = 'u8[32768]{0}', space=vmem, size = 0x8000, scoped, tag = 'input window, operand 5, single buffered']
    #allocation9 [shape = 's32[1]{0}', space=sflag, size = 0x4, scoped, tag = 'scoped memory for residual_neural_ode_forward.1']
    #allocation10 [shape = 'u8[4096]{0}', space=vmem, size = 0x1000, scoped, tag = 'output window, operand 0, single buffered']
    %12 = vsyncpa [#allocation3], 0
    %13 = vsyncpa [#allocation6], 0
    %14 = vsyncpa [#allocation9], 0
    %15 = vsyncpa [#allocation4], 0
    // Predicated region
    $region2: #{residual_neural_ode_forward.1} parent=1 // pred_check
      _
    $region3: #{residual_neural_ode_forward.1} parent=1 // pred_check_branch
      %17 = sbr.rel (0) target = $region5
    $region4: #{residual_neural_ode_forward.1} parent=1 // pred_region
      %19 = vsyncadd [#allocation3], 0
      %s21 = sshll.u32 %s0, 4
      %s22 = int_to_ptr.hbm [resolvable:$true] %s21
      %s23 = sshll.u32 [#allocation2], 4
      %s24 = int_to_ptr.vmem [resolvable:$true] %s23
      %26 = dma.hbm_to_vmem [thread:$0]  %s22, 128, %s24, [#allocation3]
    $region5: #{residual_neural_ode_forward.1} parent=1 // pred_fallthru
      _
    // Predicated region
    $region6: #{residual_neural_ode_forward.1} parent=1 // pred_check
      _
    $region7: #{residual_neural_ode_forward.1} parent=1 // pred_check_branch
      %28 = sbr.rel (0) target = $region9
    $region8: #{residual_neural_ode_forward.1} parent=1 // pred_region
      %30 = vsyncadd [#allocation6], 0
      %s32 = sshll.u32 %s1, 4
      %s33 = int_to_ptr.hbm [resolvable:$true] %s32
      %s34 = sshll.u32 [#allocation5], 4
      %s35 = int_to_ptr.vmem [resolvable:$true] %s34
      %37 = dma.hbm_to_vmem [thread:$0]  %s33, 64, %s35, [#allocation6]
    $region9: #{residual_neural_ode_forward.1} parent=1 // pred_fallthru
      _
    // Predicated region
    $region10: #{residual_neural_ode_forward.1} parent=1 // pred_check
      _
    $region11: #{residual_neural_ode_forward.1} parent=1 // pred_check_branch
      %39 = sbr.rel (0) target = $region13
    $region12: #{residual_neural_ode_forward.1} parent=1 // pred_region
      _
    $region13: #{residual_neural_ode_forward.1} parent=1 // pred_fallthru
      _
    // Predicated region
    $region14: #{residual_neural_ode_forward.1} parent=1 // pred_check
      _
    $region15: #{residual_neural_ode_forward.1} parent=1 // pred_check_branch
      %41 = sbr.rel (0) target = $region17
    $region16: #{residual_neural_ode_forward.1} parent=1 // pred_region
      %43 = vsyncadd [#allocation6], 0
      %s44 = sshll.u32 %s3, 4
      %s45 = int_to_ptr.hbm [resolvable:$true] %s44
      %s46 = sshll.u32 [#allocation7], 4
      %s47 = int_to_ptr.vmem [resolvable:$true] %s46
      %52 = dma.hbm_to_vmem [thread:$0]  %s45, 1024, %s47, [#allocation6], 64, 64, 4
    $region17: #{residual_neural_ode_forward.1} parent=1 // pred_fallthru
      _
    // Predicated region
    $region18: #{residual_neural_ode_forward.1} parent=1 // pred_check
      _
    $region19: #{residual_neural_ode_forward.1} parent=1 // pred_check_branch
      %54 = sbr.rel (0) target = $region21
    $region20: #{residual_neural_ode_forward.1} parent=1 // pred_region
      _
    $region21: #{residual_neural_ode_forward.1} parent=1 // pred_fallthru
      _
    // Predicated region
    $region22: #{residual_neural_ode_forward.1} parent=1 // pred_check
      _
    $region23: #{residual_neural_ode_forward.1} parent=1 // pred_check_branch
      %56 = sbr.rel (0) target = $region25
    $region24: #{residual_neural_ode_forward.1} parent=1 // pred_region
      %58 = vsyncadd [#allocation9], 0
      %s59 = sshll.u32 %s5, 4
      %s60 = int_to_ptr.hbm [resolvable:$true] %s59
      %s61 = sshll.u32 [#allocation8], 4
      %s62 = int_to_ptr.vmem [resolvable:$true] %s61
      %67 = dma.hbm_to_vmem [thread:$0]  %s60, 1024, %s62, [#allocation9], 64, 64, 4
    $region25: #{residual_neural_ode_forward.1} parent=1 // pred_fallthru
      _
    // Predicated region
    $region26: #{residual_neural_ode_forward.1} parent=1 // pred_check
      _
    $region27: #{residual_neural_ode_forward.1} parent=1 // pred_check_branch
      %69 = sbr.rel (0) target = $region29
    $region28: #{residual_neural_ode_forward.1} parent=1 // pred_region
      _
    $region29: #{residual_neural_ode_forward.1} parent=1 // pred_fallthru
      _
    // Predicated region
    $region30: #{residual_neural_ode_forward.1} parent=1 // pred_check
      _
    $region31: #{residual_neural_ode_forward.1} parent=1 // pred_check_branch
      %71 = sbr.rel (0) target = $region33
    $region32: #{residual_neural_ode_forward.1} parent=1 // pred_region
      %73 = dma.done [#allocation3], 128
    $region33: #{residual_neural_ode_forward.1} parent=1 // pred_fallthru
      _
    // Predicated region
    $region34: #{residual_neural_ode_forward.1} parent=1 // pred_check
      _
    $region35: #{residual_neural_ode_forward.1} parent=1 // pred_check_branch
      %75 = sbr.rel (0) target = $region37
    $region36: #{residual_neural_ode_forward.1} parent=1 // pred_region
      %77 = dma.done [#allocation6], 64
    $region37: #{residual_neural_ode_forward.1} parent=1 // pred_fallthru
      _
    // Predicated region
    $region38: #{residual_neural_ode_forward.1} parent=1 // pred_check
      _
    $region39: #{residual_neural_ode_forward.1} parent=1 // pred_check_branch
      %79 = sbr.rel (0) target = $region41
    $region40: #{residual_neural_ode_forward.1} parent=1 // pred_region
      %81 = dma.done [#allocation6], 1024
    $region41: #{residual_neural_ode_forward.1} parent=1 // pred_fallthru
      _
    // Predicated region
    $region42: #{residual_neural_ode_forward.1} parent=1 // pred_check
      _
    $region43: #{residual_neural_ode_forward.1} parent=1 // pred_check_branch
      %83 = sbr.rel (0) target = $region45
    $region44: #{residual_neural_ode_forward.1} parent=1 // pred_region
      %85 = dma.done [#allocation9], 1024
    $region45: #{residual_neural_ode_forward.1} parent=1 // pred_fallthru
      _
    %v87 = vld [vmem:[#allocation2] sm:$0xff]
    %v88 = vpack.c.bf16 %v87, %v87
    %v89 = vld [vmem:[#allocation5] sm:$0xf]
    %v90 = vld [vmem:[%s2] sm:$0x1]
    %v92 = vperm.slane %v90, 0
    %vm94 = vcmask 64512
    %v96 = vsel %vm94, %v88, 0
    %vm98 = vcmask 1043456
    %v100 = vsel %vm98, %v89, 0
    %102 = vmatpush.bf16.msra.mxu0 0
    %103 = vmatpush.bf16.msra.mxu0 0
    %104 = vmatpush.bf16.msra.mxu0 0
    %105 = vmatpush.bf16.msra.mxu0 0
    %106 = vmatpush.bf16.msra.mxu0 0
    %107 = vmatpush.bf16.msra.mxu0 0
    %108 = vmatpush.bf16.msra.mxu0 0
    %109 = vmatpush.bf16.msra.mxu0 %v100
    %110 = vmatmul.bf16.gmra.mxu0 %v96
    %v111 = vpop.f32.mrf.mxu0
    %v112 = vadd.f32 %v92, %v111
    %v113 = vpop.f32.mrf.mxu0
    %114 = vdwg.mxu0
    %v115 = vmax.f32 %v112, 0.0
    %v116 = vand.u32 2147483647, %v112
    %v117 = vsub.f32 0.0, %v116
    %v118 = vmul.f32 %v117, 1.442695
    %v119 = vpow.pop %v118
    %v120 = vadd.f32 %v119, 1.0
    %v121 = vlog2.pop %v120
    %v122 = vmul.f32 %v121, 0.6931472
    %v123 = vmul.f32 -0.5, %v119
    %v124 = vadd.f32 %v123, 1.0
    %v125 = vmul.f32 %v124, %v119
    %v126 = vand.u32 2147483647, %v119
    %vm127 = vcmp.lt.f32.partialorder %v126, 0.0004427343
    %v128 = vsel %vm127, %v125, %v122
    %v129 = vadd.f32 %v115, %v128
    %v130 = vpack.c.bf16 %v129, %v129
    %v131 = vld [vmem:[#allocation7] sm:$0xf]
    %v132 = vld [vmem:[#allocation7 + $0x4] sm:$0xf]
    %v133 = vld [vmem:[#allocation7 + $0x8] sm:$0xf]
    %v134 = vld [vmem:[#allocation7 + $0xc] sm:$0xf]
    %v135 = vld [vmem:[#allocation7 + $0x10] sm:$0xf]
    %v136 = vld [vmem:[#allocation7 + $0x14] sm:$0xf]
    %v137 = vld [vmem:[#allocation7 + $0x18] sm:$0xf]
    %v138 = vld [vmem:[#allocation7 + $0x1c] sm:$0xf]
    %v139 = vld [vmem:[#allocation7 + $0x20] sm:$0xf]
    %v140 = vld [vmem:[#allocation7 + $0x24] sm:$0xf]
    %v141 = vld [vmem:[#allocation7 + $0x28] sm:$0xf]
    %v142 = vld [vmem:[#allocation7 + $0x2c] sm:$0xf]
    %v143 = vld [vmem:[#allocation7 + $0x30] sm:$0xf]
    %v144 = vld [vmem:[#allocation7 + $0x34] sm:$0xf]
    %v145 = vld [vmem:[#allocation7 + $0x38] sm:$0xf]
    %v146 = vld [vmem:[#allocation7 + $0x3c] sm:$0xf]
    %v147 = vld [vmem:[%s4] sm:$0x1]
    %v149 = vperm.slane %v147, 0
    %v167 = vunpack.c.l.b16 %v131
    %v168 = vunpack.c.l.b16 %v132
    %v169 = vunpack.c.l.b16 %v133
    %v170 = vunpack.c.l.b16 %v134
    %v171 = vunpack.c.l.b16 %v135
    %v172 = vunpack.c.l.b16 %v136
    %v173 = vunpack.c.l.b16 %v137
    %v174 = vunpack.c.l.b16 %v138
    %v175 = vunpack.c.l.b16 %v139
    %v176 = vunpack.c.l.b16 %v140
    %v177 = vunpack.c.l.b16 %v141
    %v178 = vunpack.c.l.b16 %v142
    %v179 = vunpack.c.l.b16 %v143
    %v180 = vunpack.c.l.b16 %v144
    %v181 = vunpack.c.l.b16 %v145
    %v182 = vunpack.c.l.b16 %v146
    %v183 = vpack.c.b16 %v168, %v167
    %v184 = vpack.c.b16 %v170, %v169
    %v185 = vpack.c.b16 %v172, %v171
    %v186 = vpack.c.b16 %v174, %v173
    %v187 = vpack.c.b16 %v176, %v175
    %v188 = vpack.c.b16 %v178, %v177
    %v189 = vpack.c.b16 %v180, %v179
    %v190 = vpack.c.b16 %v182, %v181
    %199 = vmatpush.bf16.msra.mxu0 %v190
    %200 = vmatpush.bf16.msra.mxu0 %v189
    %201 = vmatpush.bf16.msra.mxu0 %v188
    %202 = vmatpush.bf16.msra.mxu0 %v187
    %203 = vmatpush.bf16.msra.mxu0 %v186
    %204 = vmatpush.bf16.msra.mxu0 %v185
    %205 = vmatpush.bf16.msra.mxu0 %v184
    %206 = vmatpush.bf16.msra.mxu0 %v183
    %207 = vmatmul.bf16.gmra.mxu0 %v130
    %v208 = vpop.f32.mrf.mxu0
    %v209 = vadd.f32 %v149, %v208
    %v210 = vpop.f32.mrf.mxu0
    %211 = vdwg.mxu0
    %v212 = vmax.f32 %v209, 0.0
    %v213 = vand.u32 2147483647, %v209
    %v214 = vsub.f32 0.0, %v213
    %v215 = vmul.f32 %v214, 1.442695
    %v216 = vpow.pop %v215
    %v217 = vadd.f32 %v216, 1.0
    %v218 = vlog2.pop %v217
    %v219 = vmul.f32 %v218, 0.6931472
    %v220 = vmul.f32 -0.5, %v216
    %v221 = vadd.f32 %v220, 1.0
    %v222 = vmul.f32 %v221, %v216
    %v223 = vand.u32 2147483647, %v216
    %vm224 = vcmp.lt.f32.partialorder %v223, 0.0004427343
    %v225 = vsel %vm224, %v222, %v219
    %v226 = vadd.f32 %v212, %v225
    %v227 = vpack.c.bf16 %v226, %v226
    %v228 = vld [vmem:[#allocation8] sm:$0xf]
    %v229 = vld [vmem:[#allocation8 + $0x4] sm:$0xf]
    %v230 = vld [vmem:[#allocation8 + $0x8] sm:$0xf]
    %v231 = vld [vmem:[#allocation8 + $0xc] sm:$0xf]
    %v232 = vld [vmem:[#allocation8 + $0x10] sm:$0xf]
    %v233 = vld [vmem:[#allocation8 + $0x14] sm:$0xf]
    %v234 = vld [vmem:[#allocation8 + $0x18] sm:$0xf]
    %v235 = vld [vmem:[#allocation8 + $0x1c] sm:$0xf]
    %v236 = vld [vmem:[#allocation8 + $0x20] sm:$0xf]
    %v237 = vld [vmem:[#allocation8 + $0x24] sm:$0xf]
    %v238 = vld [vmem:[#allocation8 + $0x28] sm:$0xf]
    %v239 = vld [vmem:[#allocation8 + $0x2c] sm:$0xf]
    %v240 = vld [vmem:[#allocation8 + $0x30] sm:$0xf]
    %v241 = vld [vmem:[#allocation8 + $0x34] sm:$0xf]
    %v242 = vld [vmem:[#allocation8 + $0x38] sm:$0xf]
    %v243 = vld [vmem:[#allocation8 + $0x3c] sm:$0xf]
    %v244 = vld [vmem:[%s6] sm:$0x1]
    %v246 = vperm.slane %v244, 0
    %v264 = vunpack.c.l.b16 %v228
    %v265 = vunpack.c.l.b16 %v229
    %v266 = vunpack.c.l.b16 %v230
    %v267 = vunpack.c.l.b16 %v231
    %v268 = vunpack.c.l.b16 %v232
    %v269 = vunpack.c.l.b16 %v233
    %v270 = vunpack.c.l.b16 %v234
    %v271 = vunpack.c.l.b16 %v235
    %v272 = vunpack.c.l.b16 %v236
    %v273 = vunpack.c.l.b16 %v237
    %v274 = vunpack.c.l.b16 %v238
    %v275 = vunpack.c.l.b16 %v239
    %v276 = vunpack.c.l.b16 %v240
    %v277 = vunpack.c.l.b16 %v241
    %v278 = vunpack.c.l.b16 %v242
    %v279 = vunpack.c.l.b16 %v243
    %v280 = vpack.c.b16 %v265, %v264
    %v281 = vpack.c.b16 %v267, %v266
    %v282 = vpack.c.b16 %v269, %v268
    %v283 = vpack.c.b16 %v271, %v270
    %v284 = vpack.c.b16 %v273, %v272
    %v285 = vpack.c.b16 %v275, %v274
    %v286 = vpack.c.b16 %v277, %v276
    %v287 = vpack.c.b16 %v279, %v278
    %296 = vmatpush.bf16.msra.mxu0 %v287
    %297 = vmatpush.bf16.msra.mxu0 %v286
    %298 = vmatpush.bf16.msra.mxu0 %v285
    %299 = vmatpush.bf16.msra.mxu0 %v284
    %300 = vmatpush.bf16.msra.mxu0 %v283
    %301 = vmatpush.bf16.msra.mxu0 %v282
    %302 = vmatpush.bf16.msra.mxu0 %v281
    %303 = vmatpush.bf16.msra.mxu0 %v280
    %304 = vmatmul.bf16.gmra.mxu0 %v227
    %v305 = vpop.f32.mrf.mxu0
    %v306 = vadd.f32 %v246, %v305
    %v307 = vpop.f32.mrf.mxu0
    %308 = vdwg.mxu0
    %309 = vst [vmem:[#allocation10] sm:$0xff] %v306
    // Predicated region
    $region46: #{residual_neural_ode_forward.1} parent=1 // pred_check
      _
    $region47: #{residual_neural_ode_forward.1} parent=1 // pred_check_branch
      %311 = sbr.rel (0) target = $region49
    $region48: #{residual_neural_ode_forward.1} parent=1 // pred_region
      %313 = vsyncadd [#allocation4], 0
      %s315 = sshll.u32 [#allocation10], 4
      %s316 = int_to_ptr.vmem [resolvable:$true] %s315
      %s317 = sshll.u32 %s7, 4
      %s318 = int_to_ptr.hbm [resolvable:$true] %s317
      %320 = dma.vmem_to_hbm [thread:$0]  %s316, 128, %s318, [#allocation4]
    $region49: #{residual_neural_ode_forward.1} parent=1 // pred_fallthru
      _
    // Predicated region
    $region50: #{residual_neural_ode_forward.1} parent=1 // pred_check
      _
    $region51: #{residual_neural_ode_forward.1} parent=1 // pred_check_branch
      %322 = sbr.rel (0) target = $region53
    $region52: #{residual_neural_ode_forward.1} parent=1 // pred_region
      %324 = dma.done [#allocation4], 128
    $region53: #{residual_neural_ode_forward.1} parent=1 // pred_fallthru
      _
    %325 = vsyncpa [#allocation3], 1
    %326 = vsyncpa [#allocation6], 1
    %327 = vsyncpa [#allocation9], 1
    %328 = vsyncpa [#allocation4], 1

</llo_original>
